<compile_context>
chip_gen: v7x
topology: tpu7x:2x2x1
jax: 0.10.0
libtpu: 0.0.40
codegen_flags: <defaults>
</compile_context>

<pallas_src>
import functools

import jax
import jax.numpy as jnp
from jax import lax
from jax.experimental import pallas as pl
from jax.experimental.pallas import tpu as pltpu


def _round_up(x, m):
    return (x + m - 1) // m * m


def _angle_block_kernel(x_ref, w1_ref, b1_ref, w2_ref, b2_ref, o_ref, *,
                        compute_dtype):
    # x_ref: [TM, Hp]   w1_ref/w2_ref: [Hp, Hp] (torch [out, in] layout)
    # b1_ref/b2_ref: [1, Hp] (f32)               o_ref: [TM, Hp]
    x = x_ref[...].astype(jnp.float32)

    # ---- linear_1(relu(x)) :  relu in f32, matmul operands in compute_dtype,
    #      f32 accumulation on the MXU, bias-add in f32. ----
    h = jnp.maximum(x, 0.0)
    h = lax.dot_general(
        h.astype(compute_dtype), w1_ref[...],
        dimension_numbers=(((1,), (1,)), ((), ())),   # x @ W^T, no transpose op
        preferred_element_type=jnp.float32)
    h = h + b1_ref[...]

    # ---- linear_2(relu(h)) ----
    h = jnp.maximum(h, 0.0)
    h = lax.dot_general(
        h.astype(compute_dtype), w2_ref[...],
        dimension_numbers=(((1,), (1,)), ((), ())),
        preferred_element_type=jnp.float32)
    h = h + b2_ref[...]

    o_ref[...] = h.astype(o_ref.dtype)


def angle_block(seq_embed, w1, b1, w2, b2, *, compute_dtype=None, block_m=512):
    """seq_embed: [..., hidden]; w1,w2: [hidden, hidden]; b1,b2: [hidden].

    compute_dtype: dtype of the matmul operands (e.g. jnp.bfloat16 on v6e/v7x
    for ~2x MXU throughput and half the weight VMEM); accumulation is f32.
    """
    orig_shape = seq_embed.shape
    hidden = orig_shape[-1]
    in_dtype = seq_embed.dtype
    if compute_dtype is None:
        compute_dtype = in_dtype
    compute_dtype = jnp.dtype(compute_dtype)

    x2d = seq_embed.reshape(-1, hidden)
    m = x2d.shape[0]

    # Lane-dense hidden (multiple of 128) and 8-aligned token tile.
    hp = _round_up(hidden, 128)
    tm = min(block_m, _round_up(m, 8))
    mp = _round_up(m, tm)

    if mp != m or hp != hidden:
        x2d = jnp.pad(x2d, ((0, mp - m), (0, hp - hidden)))

    # NOTE: in a real model the padded/cast weights should be prepared once
    # outside the hot path (they are static); here it's done per call.
    if hp != hidden:
        pad_h = ((0, hp - hidden), (0, hp - hidden))
        w1p = jnp.pad(w1, pad_h).astype(compute_dtype)
        w2p = jnp.pad(w2, pad_h).astype(compute_dtype)
        b1p = jnp.pad(b1, (0, hp - hidden)).reshape(1, hp).astype(jnp.float32)
        b2p = jnp.pad(b2, (0, hp - hidden)).reshape(1, hp).astype(jnp.float32)
    else:
        w1p = w1.astype(compute_dtype)
        w2p = w2.astype(compute_dtype)
        b1p = b1.reshape(1, hp).astype(jnp.float32)
        b2p = b2.reshape(1, hp).astype(jnp.float32)

    grid = (mp // tm,)

    # VMEM budget: double-buffered x/out tiles + resident weights/biases.
    x_bytes = jnp.dtype(in_dtype).itemsize
    w_bytes = compute_dtype.itemsize
    vmem_needed = (2 * tm * hp * x_bytes          # x tiles (double-buffered)
                   + 2 * tm * hp * x_bytes        # out tiles
                   + 2 * 2 * hp * hp * w_bytes    # weights (conservative 2x)
                   + 2 * 2 * hp * 4)              # biases
    vmem_limit = min(max(int(vmem_needed * 2), 32 << 20), 64 << 20)

    cost = pl.CostEstimate(
        flops=int(2 * 2 * mp * hp * hp),
        transcendentals=0,
        bytes_accessed=int(mp * hp * 2 * x_bytes + 2 * hp * hp * w_bytes
                           + 2 * hp * 4),
    )

    kernel = functools.partial(_angle_block_kernel, compute_dtype=compute_dtype)

    out = pl.pallas_call(
        kernel,
        out_shape=jax.ShapeDtypeStruct((mp, hp), in_dtype),
        grid_spec=pltpu.PrefetchScalarGridSpec(
            num_scalar_prefetch=0,
            grid=grid,
            in_specs=[
                pl.BlockSpec((tm, hp), lambda i: (i, 0)),      # x: tiled over M
                pl.BlockSpec((hp, hp), lambda i: (0, 0)),      # w1: resident
                pl.BlockSpec((1, hp), lambda i: (0, 0)),       # b1: resident
                pl.BlockSpec((hp, hp), lambda i: (0, 0)),      # w2: resident
                pl.BlockSpec((1, hp), lambda i: (0, 0)),       # b2: resident
            ],
            out_specs=pl.BlockSpec((tm, hp), lambda i: (i, 0)),
        ),
        compiler_params=pltpu.CompilerParams(
            dimension_semantics=("parallel",),
            vmem_limit_bytes=vmem_limit,
        ),
        cost_estimate=cost,
    )(x2d, w1p, b1p, w2p, b2p)

    return out[:m, :hidden].reshape(orig_shape)


def _reference(seq_embed, w1, b1, w2, b2):
    h = jnp.maximum(seq_embed, 0.0)
    h = h @ w1.T + b1
    h = jnp.maximum(h, 0.0)
    h = h @ w2.T + b2
    return h


if __name__ == "__main__":
    key = jax.random.PRNGKey(0)
    k_x, k_w1, k_b1, k_w2, k_b2 = jax.random.split(key, 5)

    batch, seq, hidden = 2, 8, 32
    x = jax.random.normal(k_x, (batch, seq, hidden), dtype=jnp.float32)

    # Deterministic synthetic parameters (shapes match nn.Linear(hidden, hidden)).
    w1 = jax.random.normal(k_w1, (hidden, hidden), dtype=jnp.float32) * 0.1
    b1 = jax.random.normal(k_b1, (hidden,), dtype=jnp.float32) * 0.1
    w2 = jax.random.normal(k_w2, (hidden, hidden), dtype=jnp.float32) * 0.1
    b2 = jax.random.normal(k_b2, (hidden,), dtype=jnp.float32) * 0.1

    ref = _reference(x, w1, b1, w2, b2)

    # f32 matmul path: bit-accurate vs reference.
    out = jax.block_until_ready(angle_block(x, w1, b1, w2, b2))
    assert out.shape == (batch, seq, hidden)
    assert jnp.allclose(out, ref, atol=1e-5, rtol=1e-5), "f32 path mismatch"

    # bf16-operand / f32-accumulate path (MXU-friendly on v6e/v7x).
    out_bf16 = jax.block_until_ready(
        angle_block(x, w1, b1, w2, b2, compute_dtype=jnp.bfloat16))
    assert out_bf16.shape == (batch, seq, hidden)
    assert jnp.allclose(out_bf16, ref, atol=5e-2, rtol=5e-2), "bf16 path mismatch"

    print("KERNEL_OK")
</pallas_src>

<mosaic_0001>
module attributes {stable_mosaic.version = 11 : i64} {
  func.func @_angle_block_kernel(%arg0: i32, %arg1: memref<16x128xf32, #tpu.memory_space<vmem>>, %arg2: memref<128x128xf32, #tpu.memory_space<vmem>>, %arg3: memref<1x128xf32, #tpu.memory_space<vmem>>, %arg4: memref<128x128xf32, #tpu.memory_space<vmem>>, %arg5: memref<1x128xf32, #tpu.memory_space<vmem>>, %arg6: memref<16x128xf32, #tpu.memory_space<vmem>>) attributes {dimension_semantics = [#tpu.dimension_semantics<parallel>], iteration_bounds = array<i64: 1>, scalar_prefetch = 0 : i64, scratch_operands = 0 : i64, tpu.core_type = #tpu.core_type<tc>, window_params = [{transform_indices = @transform_0, window_bounds = array<i64: 16, 128>}, {pipeline_mode = #tpu.pipeline_mode<synchronous>, transform_indices = @transform_1, window_bounds = array<i64: 128, 128>}, {pipeline_mode = #tpu.pipeline_mode<synchronous>, transform_indices = @transform_2, window_bounds = array<i64: 1, 128>}, {pipeline_mode = #tpu.pipeline_mode<synchronous>, transform_indices = @transform_3, window_bounds = array<i64: 128, 128>}, {pipeline_mode = #tpu.pipeline_mode<synchronous>, transform_indices = @transform_4, window_bounds = array<i64: 1, 128>}, {transform_indices = @transform_5, window_bounds = array<i64: 16, 128>}]} {
    %c0 = arith.constant 0 : index
    %c0_0 = arith.constant 0 : index
    %0 = vector.load %arg1[%c0, %c0_0] : memref<16x128xf32, #tpu.memory_space<vmem>>, vector<16x128xf32>
    %cst = arith.constant 0.000000e+00 : f32
    %1 = vector.broadcast %cst : f32 to vector<16x128xf32>
    %2 = arith.maximumf %0, %1 : vector<16x128xf32>
    %c0_1 = arith.constant 0 : index
    %c0_2 = arith.constant 0 : index
    %3 = vector.load %arg2[%c0_1, %c0_2] : memref<128x128xf32, #tpu.memory_space<vmem>>, vector<128x128xf32>
    %cst_3 = arith.constant dense<0.000000e+00> : vector<16x128xf32>
    %4 = tpu.matmul %2, %3, %cst_3 {dimension_numbers = #tpu.dot_dimension_numbers<[1], [1], [0], [0], [0, 0, 1, 0], [], []>} : vector<16x128xf32>, vector<128x128xf32>, vector<16x128xf32> -> vector<16x128xf32>
    %c0_4 = arith.constant 0 : index
    %c0_5 = arith.constant 0 : index
    %5 = vector.load %arg3[%c0_4, %c0_5] : memref<1x128xf32, #tpu.memory_space<vmem>>, vector<1x128xf32>
    %6 = vector.broadcast %5 : vector<1x128xf32> to vector<16x128xf32>
    %7 = arith.addf %4, %6 : vector<16x128xf32>
    %cst_6 = arith.constant 0.000000e+00 : f32
    %8 = vector.broadcast %cst_6 : f32 to vector<16x128xf32>
    %9 = arith.maximumf %7, %8 : vector<16x128xf32>
    %c0_7 = arith.constant 0 : index
    %c0_8 = arith.constant 0 : index
    %10 = vector.load %arg4[%c0_7, %c0_8] : memref<128x128xf32, #tpu.memory_space<vmem>>, vector<128x128xf32>
    %cst_9 = arith.constant dense<0.000000e+00> : vector<16x128xf32>
    %11 = tpu.matmul %9, %10, %cst_9 {dimension_numbers = #tpu.dot_dimension_numbers<[1], [1], [0], [0], [0, 0, 1, 0], [], []>} : vector<16x128xf32>, vector<128x128xf32>, vector<16x128xf32> -> vector<16x128xf32>
    %c0_10 = arith.constant 0 : index
    %c0_11 = arith.constant 0 : index
    %12 = vector.load %arg5[%c0_10, %c0_11] : memref<1x128xf32, #tpu.memory_space<vmem>>, vector<1x128xf32>
    %13 = vector.broadcast %12 : vector<1x128xf32> to vector<16x128xf32>
    %14 = arith.addf %11, %13 : vector<16x128xf32>
    %c0_12 = arith.constant 0 : index
    %c0_13 = arith.constant 0 : index
    %15 = vector.load %arg6[%c0_12, %c0_13] : memref<16x128xf32, #tpu.memory_space<vmem>>, vector<16x128xf32>
    tpu.vector_store %arg6[%c0_12, %c0_13], %14 {strides = array<i32>} : memref<16x128xf32, #tpu.memory_space<vmem>>, vector<16x128xf32>,
    return
  }
  func.func @transform_0(%arg0: i32) -> (i32, i32) {
    %c0_i32 = arith.constant 0 : i32
    %c0_i32_0 = arith.constant 0 : i32
    return %arg0, %c0_i32 : i32, i32
  }
  func.func @transform_1(%arg0: i32) -> (i32, i32) {
    %c0_i32 = arith.constant 0 : i32
    %c0_i32_0 = arith.constant 0 : i32
    %c0_i32_1 = arith.constant 0 : i32
    return %c0_i32, %c0_i32_0 : i32, i32
  }
  func.func @transform_2(%arg0: i32) -> (i32, i32) {
    %c0_i32 = arith.constant 0 : i32
    %c0_i32_0 = arith.constant 0 : i32
    %c0_i32_1 = arith.constant 0 : i32
    return %c0_i32, %c0_i32_0 : i32, i32
  }
  func.func @transform_3(%arg0: i32) -> (i32, i32) {
    %c0_i32 = arith.constant 0 : i32
    %c0_i32_0 = arith.constant 0 : i32
    %c0_i32_1 = arith.constant 0 : i32
    return %c0_i32, %c0_i32_0 : i32, i32
  }
  func.func @transform_4(%arg0: i32) -> (i32, i32) {
    %c0_i32 = arith.constant 0 : i32
    %c0_i32_0 = arith.constant 0 : i32
    %c0_i32_1 = arith.constant 0 : i32
    return %c0_i32, %c0_i32_0 : i32, i32
  }
  func.func @transform_5(%arg0: i32) -> (i32, i32) {
    %c0_i32 = arith.constant 0 : i32
    %c0_i32_0 = arith.constant 0 : i32
    return %arg0, %c0_i32 : i32, i32
  }
}

</mosaic_0001>

<llo_original>
// kernel: tpu_custom_call.1
$region0: #{tpu_custom_call.1}
  #allocation0 [shape = 'u32[]', space=smem, size = 0x4, offset = 0x4, fixed_abs, tag = 'smem constant byte address 0x4 - core index']
  #allocation1 [shape = 'u32[144,128]{1,0:T(1,128)}', space=vmem, size = 0x12000, scoped, tag = 'internal scratch']
  %s0 = inlined_call_operand.hbm [shape: f32[16,128], index: 0, kind: input, shape index: {}]
  %s1 = inlined_call_operand.hbm [shape: f32[128,128], index: 1, kind: input, shape index: {}]
  %s2 = inlined_call_operand.vmem [shape: f32[1,128], index: 2, kind: input, shape index: {}]
  %s3 = inlined_call_operand.hbm [shape: f32[128,128], index: 3, kind: input, shape index: {}]
  %s4 = inlined_call_operand.vmem [shape: f32[1,128], index: 4, kind: input, shape index: {}]
  %s5 = inlined_call_operand.hbm [shape: f32[16,128], index: 5, kind: output, shape index: {}]
  %s6 = sld [smem:[#allocation0]]
  $region42: #{tpu_custom_call.1} parent=0
    _
  %s8 = ssub.s32 1, %s6
  %s9 = scalar_select 0, %s8, %s6
  $region1: #{tpu_custom_call.1} parent=0
    #allocation2 [shape = 'u8[8192]{0}', space=vmem, size = 0x2000, scoped, tag = 'input window, operand 0, single buffered']
    #allocation3 [shape = 's32[1]{0}', space=sflag, size = 0x4, scoped, tag = 'scoped memory for tpu_custom_call.1']
    #allocation4 [shape = 's32[1]{0}', space=sflag, size = 0x4, scoped, tag = 'scoped memory for tpu_custom_call.1']
    #allocation5 [shape = 'u8[65536]{0}', space=vmem, size = 0x10000, scoped, tag = 'input window, operand 1, single buffered']
    #allocation6 [shape = 's32[1]{0}', space=sflag, size = 0x4, scoped, tag = 'scoped memory for tpu_custom_call.1']
    #allocation7 [shape = 'u8[65536]{0}', space=vmem, size = 0x10000, scoped, tag = 'input window, operand 3, single buffered']
    #allocation8 [shape = 'u8[8192]{0}', space=vmem, size = 0x2000, scoped, tag = 'output window, operand 0, single buffered']
    %10 = vsyncpa [#allocation3], 0
    %11 = vsyncpa [#allocation6], 0
    %12 = vsyncpa [#allocation4], 0
    // Predicated region
    $region2: #{tpu_custom_call.1} parent=1 // pred_check
      _
    $region3: #{tpu_custom_call.1} parent=1 // pred_check_branch
      %14 = sbr.rel (0) target = $region5
    $region4: #{tpu_custom_call.1} parent=1 // pred_region
      %s16 = ssub.s32 256, 256
      %17 = vsyncadd [#allocation3], %s16
      %s18 = sshll.u32 [#allocation2], 4
      %s19 = int_to_ptr.vmem [resolvable:$true] %s18
      %24 = dma.hbm_to_vmem [thread:$0]  %s0, 256, %s19, [#allocation3], 128, 128, 8
    $region5: #{tpu_custom_call.1} parent=1 // pred_fallthru
      _
    // Predicated region
    $region6: #{tpu_custom_call.1} parent=1 // pred_check
      _
    $region7: #{tpu_custom_call.1} parent=1 // pred_check_branch
      %26 = sbr.rel (0) target = $region9
    $region8: #{tpu_custom_call.1} parent=1 // pred_region
      %s28 = ssub.s32 2048, 2048
      %29 = vsyncadd [#allocation6], %s28
      %s30 = sshll.u32 [#allocation5], 4
      %s31 = int_to_ptr.vmem [resolvable:$true] %s30
      %36 = dma.hbm_to_vmem [thread:$0]  %s1, 2048, %s31, [#allocation6], 128, 128, 8
    $region9: #{tpu_custom_call.1} parent=1 // pred_fallthru
      _
    // Predicated region
    $region10: #{tpu_custom_call.1} parent=1 // pred_check
      _
    $region11: #{tpu_custom_call.1} parent=1 // pred_check_branch
      %38 = sbr.rel (0) target = $region13
    $region12: #{tpu_custom_call.1} parent=1 // pred_region
      _
    $region13: #{tpu_custom_call.1} parent=1 // pred_fallthru
      _
    // Predicated region
    $region14: #{tpu_custom_call.1} parent=1 // pred_check
      _
    $region15: #{tpu_custom_call.1} parent=1 // pred_check_branch
      %40 = sbr.rel (0) target = $region17
    $region16: #{tpu_custom_call.1} parent=1 // pred_region
      %s42 = ssub.s32 2048, 2048
      %43 = vsyncadd [#allocation6], %s42
      %s44 = sshll.u32 [#allocation7], 4
      %s45 = int_to_ptr.vmem [resolvable:$true] %s44
      %50 = dma.hbm_to_vmem [thread:$0]  %s3, 2048, %s45, [#allocation6], 128, 128, 8
    $region17: #{tpu_custom_call.1} parent=1 // pred_fallthru
      _
    // Predicated region
    $region18: #{tpu_custom_call.1} parent=1 // pred_check
      _
    $region19: #{tpu_custom_call.1} parent=1 // pred_check_branch
      %52 = sbr.rel (0) target = $region21
    $region20: #{tpu_custom_call.1} parent=1 // pred_region
      _
    $region21: #{tpu_custom_call.1} parent=1 // pred_fallthru
      _
    // Predicated region
    $region22: #{tpu_custom_call.1} parent=1 // pred_check
      _
    $region23: #{tpu_custom_call.1} parent=1 // pred_check_branch
      %54 = sbr.rel (0) target = $region25
    $region24: #{tpu_custom_call.1} parent=1 // pred_region
      %55 = dma.done [#allocation3], 256
    $region25: #{tpu_custom_call.1} parent=1 // pred_fallthru
      _
    // Predicated region
    $region26: #{tpu_custom_call.1} parent=1 // pred_check
      _
    $region27: #{tpu_custom_call.1} parent=1 // pred_check_branch
      %57 = sbr.rel (0) target = $region29
    $region28: #{tpu_custom_call.1} parent=1 // pred_region
      %58 = dma.done [#allocation6], 2048
    $region29: #{tpu_custom_call.1} parent=1 // pred_fallthru
      _
    // Predicated region
    $region30: #{tpu_custom_call.1} parent=1 // pred_check
      _
    $region31: #{tpu_custom_call.1} parent=1 // pred_check_branch
      %60 = sbr.rel (0) target = $region33
    $region32: #{tpu_custom_call.1} parent=1 // pred_region
      %61 = dma.done [#allocation6], 2048
    $region33: #{tpu_custom_call.1} parent=1 // pred_fallthru
      _
    %v62 = vld [vmem:[#allocation2] sm:$0xff]
    %v63 = vld [vmem:[#allocation2 + $0x8] sm:$0xff]
    %v64 = vmax.f32 %v62, 0.0
    %v65 = vmax.f32 %v63, 0.0
    %v66 = vld [vmem:[#allocation5] sm:$0xff]
    %v67 = vld [vmem:[#allocation5 + $0x8] sm:$0xff]
    %v68 = vld [vmem:[#allocation5 + $0x10] sm:$0xff]
    %v69 = vld [vmem:[#allocation5 + $0x18] sm:$0xff]
    %v70 = vld [vmem:[#allocation5 + $0x20] sm:$0xff]
    %v71 = vld [vmem:[#allocation5 + $0x28] sm:$0xff]
    %v72 = vld [vmem:[#allocation5 + $0x30] sm:$0xff]
    %v73 = vld [vmem:[#allocation5 + $0x38] sm:$0xff]
    %v74 = vld [vmem:[#allocation5 + $0x40] sm:$0xff]
    %v75 = vld [vmem:[#allocation5 + $0x48] sm:$0xff]
    %v76 = vld [vmem:[#allocation5 + $0x50] sm:$0xff]
    %v77 = vld [vmem:[#allocation5 + $0x58] sm:$0xff]
    %v78 = vld [vmem:[#allocation5 + $0x60] sm:$0xff]
    %v79 = vld [vmem:[#allocation5 + $0x68] sm:$0xff]
    %v80 = vld [vmem:[#allocation5 + $0x70] sm:$0xff]
    %v81 = vld [vmem:[#allocation5 + $0x78] sm:$0xff]
    %v82 = vld [vmem:[%s2] sm:$0x1]
    %v84 = vlaneseq
    %v85 = vshrl.u32 %v84, 7
    %v86 = vsub.s32 0, %v85
    %v87 = vrot.slane %v82, %v86
    %89 = vmatprep.subr.mxu0 0.0
    %90 = vmatpush1.xpose.msra.mxu0 %v66
    %91 = vmatprep.subr.mxu0 0.0
    %92 = vmatpush1.xpose.msra.mxu0 %v67
    %93 = vmatprep.subr.mxu0 0.0
    %94 = vmatpush1.xpose.msra.mxu0 %v68
    %95 = vmatprep.subr.mxu0 0.0
    %96 = vmatpush1.xpose.msra.mxu0 %v69
    %97 = vmatprep.subr.mxu0 0.0
    %98 = vmatpush1.xpose.msra.mxu0 %v70
    %99 = vmatprep.subr.mxu0 0.0
    %100 = vmatpush1.xpose.msra.mxu0 %v71
    %101 = vmatprep.subr.mxu0 0.0
    %102 = vmatpush1.xpose.msra.mxu0 %v72
    %103 = vmatprep.subr.mxu0 0.0
    %104 = vmatpush1.xpose.msra.mxu0 %v73
    %105 = vmatprep.subr.mxu0 0.0
    %106 = vmatpush1.xpose.msra.mxu0 %v74
    %107 = vmatprep.subr.mxu0 0.0
    %108 = vmatpush1.xpose.msra.mxu0 %v75
    %109 = vmatprep.subr.mxu0 0.0
    %110 = vmatpush1.xpose.msra.mxu0 %v76
    %111 = vmatprep.subr.mxu0 0.0
    %112 = vmatpush1.xpose.msra.mxu0 %v77
    %113 = vmatprep.subr.mxu0 0.0
    %114 = vmatpush1.xpose.msra.mxu0 %v78
    %115 = vmatprep.subr.mxu0 0.0
    %116 = vmatpush1.xpose.msra.mxu0 %v79
    %117 = vmatprep.subr.mxu0 0.0
    %118 = vmatpush1.xpose.msra.mxu0 %v80
    %119 = vmatprep.subr.mxu0 0.0
    %120 = vmatpush1.xpose.msra.mxu0 %v81
    %121 = vmatprep.subr.mxu0 0.0
    %122 = vmatpush1.xpose.msra.mxu0 0.0
    %123 = vmatprep.subr.mxu0 0.0
    %124 = vmatpush1.xpose.msra.mxu0 0.0
    %125 = vmatprep.subr.mxu0 0.0
    %126 = vmatpush1.xpose.msra.mxu0 0.0
    %127 = vmatprep.subr.mxu0 0.0
    %128 = vmatpush1.xpose.msra.mxu0 0.0
    %129 = vmatprep.subr.mxu0 0.0
    %130 = vmatpush1.xpose.msra.mxu0 0.0
    %131 = vmatprep.subr.mxu0 0.0
    %132 = vmatpush1.xpose.msra.mxu0 0.0
    %133 = vmatprep.subr.mxu0 0.0
    %134 = vmatpush1.xpose.msra.mxu0 0.0
    %135 = vmatprep.subr.mxu0 0.0
    %136 = vmatpush1.xpose.msra.mxu0 0.0
    %137 = vmatprep.subr.mxu0 0.0
    %138 = vmatpush1.xpose.msra.mxu0 0.0
    %139 = vmatprep.subr.mxu0 0.0
    %140 = vmatpush1.xpose.msra.mxu0 0.0
    %141 = vmatprep.subr.mxu0 0.0
    %142 = vmatpush1.xpose.msra.mxu0 0.0
    %143 = vmatprep.subr.mxu0 0.0
    %144 = vmatpush1.xpose.msra.mxu0 0.0
    %145 = vmatprep.subr.mxu0 0.0
    %146 = vmatpush1.xpose.msra.mxu0 0.0
    %147 = vmatprep.subr.mxu0 0.0
    %148 = vmatpush1.xpose.msra.mxu0 0.0
    %149 = vmatprep.subr.mxu0 0.0
    %150 = vmatpush1.xpose.msra.mxu0 0.0
    %151 = vmatprep.subr.mxu0 0.0
    %152 = vmatpush1.xpose.msra.mxu0 0.0
    %153 = vmatprep.mubr.f32.mxu0 0.0
    %154 = vmatmul.mubr.f32.gmra.mrb[0].mxu0 %v64
    %v155 = vpop.f32.mrb[0].mxu0
    %v156 = vadd.f32 %v87, %v155
    %v157 = vpop.f32.mrb[0].mxu0
    %158 = vmatprep.mubr.f32.mxu0 0.0
    %159 = vmatmul.mubr.f32.gmra.mrb[0].mxu0 %v65
    %v160 = vpop.f32.mrb[0].mxu0
    %v161 = vadd.f32 %v87, %v160
    %v162 = vpop.f32.mrb[0].mxu0
    %163 = vdwg.mxu0
    %v164 = vmax.f32 %v156, 0.0
    %v165 = vmax.f32 %v161, 0.0
    %v166 = vld [vmem:[#allocation7] sm:$0xff]
    %v167 = vld [vmem:[#allocation7 + $0x8] sm:$0xff]
    %v168 = vld [vmem:[#allocation7 + $0x10] sm:$0xff]
    %v169 = vld [vmem:[#allocation7 + $0x18] sm:$0xff]
    %v170 = vld [vmem:[#allocation7 + $0x20] sm:$0xff]
    %v171 = vld [vmem:[#allocation7 + $0x28] sm:$0xff]
    %v172 = vld [vmem:[#allocation7 + $0x30] sm:$0xff]
    %v173 = vld [vmem:[#allocation7 + $0x38] sm:$0xff]
    %v174 = vld [vmem:[#allocation7 + $0x40] sm:$0xff]
    %v175 = vld [vmem:[#allocation7 + $0x48] sm:$0xff]
    %v176 = vld [vmem:[#allocation7 + $0x50] sm:$0xff]
    %v177 = vld [vmem:[#allocation7 + $0x58] sm:$0xff]
    %v178 = vld [vmem:[#allocation7 + $0x60] sm:$0xff]
    %v179 = vld [vmem:[#allocation7 + $0x68] sm:$0xff]
    %v180 = vld [vmem:[#allocation7 + $0x70] sm:$0xff]
    %v181 = vld [vmem:[#allocation7 + $0x78] sm:$0xff]
    %v182 = vld [vmem:[%s4] sm:$0x1]
    %v184 = vlaneseq
    %v185 = vshrl.u32 %v184, 7
    %v186 = vsub.s32 0, %v185
    %v187 = vrot.slane %v182, %v186
    %189 = vmatprep.subr.mxu0 0.0
    %190 = vmatpush1.xpose.msra.mxu0 %v166
    %191 = vmatprep.subr.mxu0 0.0
    %192 = vmatpush1.xpose.msra.mxu0 %v167
    %193 = vmatprep.subr.mxu0 0.0
    %194 = vmatpush1.xpose.msra.mxu0 %v168
    %195 = vmatprep.subr.mxu0 0.0
    %196 = vmatpush1.xpose.msra.mxu0 %v169
    %197 = vmatprep.subr.mxu0 0.0
    %198 = vmatpush1.xpose.msra.mxu0 %v170
    %199 = vmatprep.subr.mxu0 0.0
    %200 = vmatpush1.xpose.msra.mxu0 %v171
    %201 = vmatprep.subr.mxu0 0.0
    %202 = vmatpush1.xpose.msra.mxu0 %v172
    %203 = vmatprep.subr.mxu0 0.0
    %204 = vmatpush1.xpose.msra.mxu0 %v173
    %205 = vmatprep.subr.mxu0 0.0
    %206 = vmatpush1.xpose.msra.mxu0 %v174
    %207 = vmatprep.subr.mxu0 0.0
    %208 = vmatpush1.xpose.msra.mxu0 %v175
    %209 = vmatprep.subr.mxu0 0.0
    %210 = vmatpush1.xpose.msra.mxu0 %v176
    %211 = vmatprep.subr.mxu0 0.0
    %212 = vmatpush1.xpose.msra.mxu0 %v177
    %213 = vmatprep.subr.mxu0 0.0
    %214 = vmatpush1.xpose.msra.mxu0 %v178
    %215 = vmatprep.subr.mxu0 0.0
    %216 = vmatpush1.xpose.msra.mxu0 %v179
    %217 = vmatprep.subr.mxu0 0.0
    %218 = vmatpush1.xpose.msra.mxu0 %v180
    %219 = vmatprep.subr.mxu0 0.0
    %220 = vmatpush1.xpose.msra.mxu0 %v181
    %221 = vmatprep.subr.mxu0 0.0
    %222 = vmatpush1.xpose.msra.mxu0 0.0
    %223 = vmatprep.subr.mxu0 0.0
    %224 = vmatpush1.xpose.msra.mxu0 0.0
    %225 = vmatprep.subr.mxu0 0.0
    %226 = vmatpush1.xpose.msra.mxu0 0.0
    %227 = vmatprep.subr.mxu0 0.0
    %228 = vmatpush1.xpose.msra.mxu0 0.0
    %229 = vmatprep.subr.mxu0 0.0
    %230 = vmatpush1.xpose.msra.mxu0 0.0
    %231 = vmatprep.subr.mxu0 0.0
    %232 = vmatpush1.xpose.msra.mxu0 0.0
    %233 = vmatprep.subr.mxu0 0.0
    %234 = vmatpush1.xpose.msra.mxu0 0.0
    %235 = vmatprep.subr.mxu0 0.0
    %236 = vmatpush1.xpose.msra.mxu0 0.0
    %237 = vmatprep.subr.mxu0 0.0
    %238 = vmatpush1.xpose.msra.mxu0 0.0
    %239 = vmatprep.subr.mxu0 0.0
    %240 = vmatpush1.xpose.msra.mxu0 0.0
    %241 = vmatprep.subr.mxu0 0.0
    %242 = vmatpush1.xpose.msra.mxu0 0.0
    %243 = vmatprep.subr.mxu0 0.0
    %244 = vmatpush1.xpose.msra.mxu0 0.0
    %245 = vmatprep.subr.mxu0 0.0
    %246 = vmatpush1.xpose.msra.mxu0 0.0
    %247 = vmatprep.subr.mxu0 0.0
    %248 = vmatpush1.xpose.msra.mxu0 0.0
    %249 = vmatprep.subr.mxu0 0.0
    %250 = vmatpush1.xpose.msra.mxu0 0.0
    %251 = vmatprep.subr.mxu0 0.0
    %252 = vmatpush1.xpose.msra.mxu0 0.0
    %253 = vmatprep.mubr.f32.mxu0 0.0
    %254 = vmatmul.mubr.f32.gmra.mrb[0].mxu0 %v164
    %v255 = vpop.f32.mrb[0].mxu0
    %v256 = vadd.f32 %v187, %v255
    %v257 = vpop.f32.mrb[0].mxu0
    %258 = vmatprep.mubr.f32.mxu0 0.0
    %259 = vmatmul.mubr.f32.gmra.mrb[0].mxu0 %v165
    %v260 = vpop.f32.mrb[0].mxu0
    %v261 = vadd.f32 %v187, %v260
    %v262 = vpop.f32.mrb[0].mxu0
    %263 = vdwg.mxu0
    %264 = vst [vmem:[#allocation8] sm:$0xff] %v256
    %265 = vst [vmem:[#allocation8 + $0x8] sm:$0xff] %v261
    // Predicated region
    $region34: #{tpu_custom_call.1} parent=1 // pred_check
      _
    $region35: #{tpu_custom_call.1} parent=1 // pred_check_branch
      %267 = sbr.rel (0) target = $region37
    $region36: #{tpu_custom_call.1} parent=1 // pred_region
      %s269 = ssub.s32 256, 256
      %270 = vsyncadd [#allocation4], %s269
      %s271 = sshll.u32 [#allocation8], 4
      %s272 = int_to_ptr.vmem [resolvable:$true] %s271
      %277 = dma.vmem_to_hbm [thread:$0]  %s272, 256, %s5, [#allocation4], 128, 128, 8
    $region37: #{tpu_custom_call.1} parent=1 // pred_fallthru
      _
    // Predicated region
    $region38: #{tpu_custom_call.1} parent=1 // pred_check
      _
    $region39: #{tpu_custom_call.1} parent=1 // pred_check_branch
      %279 = sbr.rel (0) target = $region41
    $region40: #{tpu_custom_call.1} parent=1 // pred_region
      %280 = dma.done [#allocation4], 256
    $region41: #{tpu_custom_call.1} parent=1 // pred_fallthru
      _
    %281 = vsyncpa [#allocation3], 1
    %282 = vsyncpa [#allocation6], 1
    %283 = vsyncpa [#allocation4], 1

</llo_original>
